<compile_context>
chip_gen: v6e
topology: v6e:2x2x1
jax: 0.10.0
libtpu: 0.0.40
codegen_flags: <defaults>
</compile_context>

<pallas_src>
import functools

import jax
import jax.numpy as jnp
from jax.experimental import pallas as pl
from jax.experimental.pallas import tpu as pltpu


BN_EPS = 1e-5
LANE = 128


def _round_up(n, m):
    return ((n + m - 1) // m) * m


def _pad2(a, rows, cols):
    r, c = a.shape
    return jnp.pad(a, ((0, rows - r), (0, cols - c)))


# ----------------------------- fused kernel ---------------------------------

def actor_fused_kernel(x_ref, w1_ref, g_ref, be_ref, w2_ref, b2_ref,
                       w3_ref, b3_ref, o_ref, sum_ref, sq_ref, *, tb, b_true):
    p = pl.program_id(0)          # 0: accumulate BN stats, 1: normalize + MLP
    i = pl.program_id(1)          # batch tile index

    # fc1 on the MXU (bf16 inputs, f32 accumulation).  The fc1 bias is omitted
    # on purpose: BatchNorm's per-feature mean subtraction cancels it exactly.
    h1 = jnp.dot(x_ref[...].astype(jnp.bfloat16), w1_ref[...],
                 preferred_element_type=jnp.float32)            # (TB, H0P)

    @pl.when(jnp.logical_and(p == 0, i == 0))
    def _():
        sum_ref[...] = jnp.zeros_like(sum_ref)
        sq_ref[...] = jnp.zeros_like(sq_ref)

    @pl.when(p == 0)
    def _():
        # Mask batch-padding rows so BN statistics cover only the true batch.
        row = i * tb + jax.lax.broadcasted_iota(jnp.int32, (tb, 1), 0)
        valid = (row < b_true).astype(jnp.float32)              # (TB, 1)
        hv = h1 * valid
        sum_ref[...] += jnp.sum(hv, axis=0, keepdims=True)      # (1, H0P)
        sq_ref[...] += jnp.sum(hv * hv, axis=0, keepdims=True)  # (1, H0P)

    @pl.when(p == 1)
    def _():
        inv_b = jnp.float32(1.0 / b_true)
        mean = sum_ref[...] * inv_b                             # (1, H0P)
        var = jnp.maximum(sq_ref[...] * inv_b - mean * mean, 0.0)  # biased var
        scale = g_ref[...] * jax.lax.rsqrt(var + BN_EPS)        # gamma folded

        a1 = jnp.maximum((h1 - mean) * scale + be_ref[...], 0.0)

        h2 = jnp.dot(a1.astype(jnp.bfloat16), w2_ref[...],
                     preferred_element_type=jnp.float32) + b2_ref[...]
        a2 = jnp.maximum(h2, 0.0)

        h3 = jnp.dot(a2.astype(jnp.bfloat16), w3_ref[...],
                     preferred_element_type=jnp.float32) + b3_ref[...]
        o_ref[...] = jnp.tanh(h3)


# --------------------------------- wrapper ----------------------------------

@functools.partial(jax.jit, static_argnames=("block_rows",))
def actor_forward(x, w1, b1, gamma, beta, w2, b2, w3, b3, *, block_rows=None):
    del b1  # exactly cancelled by BatchNorm's mean subtraction

    B, c_in = x.shape
    h0 = w1.shape[1]
    h1_dim = w2.shape[1]
    out_dim = w3.shape[1]

    # Lane-pad the hidden / output feature dims to multiples of 128.
    h0p = _round_up(h0, LANE)
    h1p = _round_up(h1_dim, LANE)
    outp = _round_up(out_dim, LANE)

    # Batch tiling (TB capped at 512 rows: a few hundred KB of VMEM per tile
    # even double-buffered).
    if block_rows is None:
        tb = min(512, _round_up(B, 8))
    else:
        tb = block_rows
    tb = _round_up(tb, 8)
    b_pad = _round_up(B, tb)
    n_tiles = b_pad // tb

    xp = jnp.pad(x, ((0, b_pad - B), (0, 0))).astype(jnp.float32)
    w1p = _pad2(w1, c_in, h0p).astype(jnp.bfloat16)
    gp = _pad2(gamma, 1, h0p).astype(jnp.float32)
    bep = _pad2(beta, 1, h0p).astype(jnp.float32)
    w2p = _pad2(w2, h0p, h1p).astype(jnp.bfloat16)
    b2p = _pad2(b2, 1, h1p).astype(jnp.float32)
    w3p = _pad2(w3, h1p, outp).astype(jnp.bfloat16)
    b3p = _pad2(b3, 1, outp).astype(jnp.float32)

    # fc1 runs in both passes (cheap); fc2/fc3 only in pass 1.
    flops = (2 * 2 * b_pad * c_in * h0p
             + 2 * b_pad * (h0p * h1p + h1p * outp)
             + 8 * b_pad * h0p)
    bytes_accessed = (2 * xp.size * 4                       # x read in both passes
                      + (w1p.size + w2p.size + w3p.size) * 2
                      + (4 * h0p + h1p + outp) * 4
                      + b_pad * outp * 4)                   # output write

    # Output index_map: resident dummy block (0,0) during pass 0 (never written
    # back), real per-tile blocks (i,0) during pass 1.
    out_pad = pl.pallas_call(
        functools.partial(actor_fused_kernel, tb=tb, b_true=B),
        out_shape=jax.ShapeDtypeStruct((b_pad, outp), jnp.float32),
        grid_spec=pltpu.PrefetchScalarGridSpec(
            num_scalar_prefetch=0,
            grid=(2, n_tiles),
            in_specs=[pl.BlockSpec((tb, c_in), lambda p, i: (i, 0)),
                      pl.BlockSpec((c_in, h0p), lambda p, i: (0, 0)),
                      pl.BlockSpec((1, h0p), lambda p, i: (0, 0)),
                      pl.BlockSpec((1, h0p), lambda p, i: (0, 0)),
                      pl.BlockSpec((h0p, h1p), lambda p, i: (0, 0)),
                      pl.BlockSpec((1, h1p), lambda p, i: (0, 0)),
                      pl.BlockSpec((h1p, outp), lambda p, i: (0, 0)),
                      pl.BlockSpec((1, outp), lambda p, i: (0, 0))],
            out_specs=pl.BlockSpec((tb, outp), lambda p, i: (p * i, 0)),
            scratch_shapes=[pltpu.VMEM((1, h0p), jnp.float32),
                            pltpu.VMEM((1, h0p), jnp.float32)]),
        compiler_params=pltpu.CompilerParams(
            dimension_semantics=("arbitrary", "arbitrary")),
        cost_estimate=pl.CostEstimate(
            flops=flops,
            transcendentals=b_pad * outp + n_tiles * h0p,
            bytes_accessed=bytes_accessed),
    )(xp, w1p, gp, bep, w2p, b2p, w3p, b3p)

    return out_pad[:B, :out_dim]


# ------------------------------ params / reference --------------------------

def init_params(key, in_channels, out_channels, hidden_layers=(64, 64)):
    """Deterministic init mirroring ActorNetwork.reset_params / PyTorch defaults."""
    h0, h1 = hidden_layers
    ks = jax.random.split(key, 6)

    # reset_params uses 1/sqrt(weight.size(0)) == 1/sqrt(out_features) for fc1/fc2.
    lm1 = 1.0 / jnp.sqrt(jnp.float32(h0))
    lm2 = 1.0 / jnp.sqrt(jnp.float32(h1))

    # weights stored transposed: (in, out)
    w1 = jax.random.uniform(ks[0], (in_channels, h0), jnp.float32, -lm1, lm1)
    w2 = jax.random.uniform(ks[1], (h0, h1), jnp.float32, -lm2, lm2)
    w3 = jax.random.uniform(ks[2], (h1, out_channels), jnp.float32, -0.003, 0.003)

    # biases keep PyTorch Linear default: U(-1/sqrt(fan_in), 1/sqrt(fan_in))
    bb1 = 1.0 / jnp.sqrt(jnp.float32(in_channels))
    bb2 = 1.0 / jnp.sqrt(jnp.float32(h0))
    bb3 = 1.0 / jnp.sqrt(jnp.float32(h1))
    b1 = jax.random.uniform(ks[3], (1, h0), jnp.float32, -bb1, bb1)
    b2 = jax.random.uniform(ks[4], (1, h1), jnp.float32, -bb2, bb2)
    b3 = jax.random.uniform(ks[5], (1, out_channels), jnp.float32, -bb3, bb3)

    # BatchNorm1d defaults: gamma = 1, beta = 0
    gamma = jnp.ones((1, h0), jnp.float32)
    beta = jnp.zeros((1, h0), jnp.float32)

    return w1, b1, gamma, beta, w2, b2, w3, b3


def reference_forward(x, w1, b1, gamma, beta, w2, b2, w3, b3,
                      matmul_dtype=jnp.float32):
    dot = lambda a, w: jnp.dot(a.astype(matmul_dtype), w.astype(matmul_dtype),
                               preferred_element_type=jnp.float32)
    h1 = dot(x, w1) + b1
    mean = jnp.mean(h1, axis=0, keepdims=True)
    var = jnp.mean((h1 - mean) ** 2, axis=0, keepdims=True)     # biased var
    a1 = jnp.maximum((h1 - mean) * jax.lax.rsqrt(var + BN_EPS) * gamma + beta, 0.0)
    a2 = jnp.maximum(dot(a1, w2) + b2, 0.0)
    return jnp.tanh(dot(a2, w3) + b3)


if __name__ == "__main__":
    B, C_IN, C_OUT = 200, 16, 8          # B=200 exercises tiling + row masking
    HIDDEN = (64, 64)

    key = jax.random.PRNGKey(0)
    k_x, k_p = jax.random.split(key)

    x = jax.random.normal(k_x, (B, C_IN), jnp.float32)
    params = init_params(k_p, C_IN, C_OUT, HIDDEN)

    # block_rows=128 -> 2 batch tiles (second one partially padded/masked).
    out = actor_forward(x, *params, block_rows=128)
    out = jax.block_until_ready(out)
    assert out.shape == (B, C_OUT)
    assert bool(jnp.all(jnp.isfinite(out)))

    # Like-for-like reference (bf16 MXU inputs, f32 accumulation / BN / tanh).
    ref_bf16 = reference_forward(x, *params, matmul_dtype=jnp.bfloat16)
    assert jnp.allclose(out, ref_bf16, atol=1e-4, rtol=1e-4), \
        "mismatch vs bf16-matmul reference"

    # Sanity vs full-f32 reference (difference is bf16 matmul rounding only).
    ref_f32 = reference_forward(x, *params, matmul_dtype=jnp.float32)
    assert jnp.allclose(out, ref_f32, atol=3e-2, rtol=3e-2), \
        "mismatch vs f32 reference"

    # Also exercise the single-tile fast path (whole batch in one tile).
    out1 = jax.block_until_ready(actor_forward(x, *params, block_rows=256))
    assert jnp.allclose(out1, out, atol=1e-5, rtol=1e-5)

    print("KERNEL_OK")
</pallas_src>

<mosaic_0001>
module attributes {stable_mosaic.version = 11 : i64} {
  func.func @actor_fused_kernel(%arg0: i32, %arg1: i32, %arg2: memref<128x16xf32, #tpu.memory_space<vmem>>, %arg3: memref<16x128xbf16, #tpu.memory_space<vmem>>, %arg4: memref<1x128xf32, #tpu.memory_space<vmem>>, %arg5: memref<1x128xf32, #tpu.memory_space<vmem>>, %arg6: memref<128x128xbf16, #tpu.memory_space<vmem>>, %arg7: memref<1x128xf32, #tpu.memory_space<vmem>>, %arg8: memref<128x128xbf16, #tpu.memory_space<vmem>>, %arg9: memref<1x128xf32, #tpu.memory_space<vmem>>, %arg10: memref<128x128xf32, #tpu.memory_space<vmem>>, %arg11: memref<1x128xf32, #tpu.memory_space<vmem>>, %arg12: memref<1x128xf32, #tpu.memory_space<vmem>>) attributes {dimension_semantics = [#tpu.dimension_semantics<arbitrary>, #tpu.dimension_semantics<arbitrary>], iteration_bounds = array<i64: 2, 2>, scalar_prefetch = 0 : i64, scratch_operands = 2 : i64, tpu.core_type = #tpu.core_type<tc>, window_params = [{transform_indices = @transform_0, window_bounds = array<i64: 128, 16>}, {pipeline_mode = #tpu.pipeline_mode<synchronous>, transform_indices = @transform_1, window_bounds = array<i64: 16, 128>}, {pipeline_mode = #tpu.pipeline_mode<synchronous>, transform_indices = @transform_2, window_bounds = array<i64: 1, 128>}, {pipeline_mode = #tpu.pipeline_mode<synchronous>, transform_indices = @transform_3, window_bounds = array<i64: 1, 128>}, {pipeline_mode = #tpu.pipeline_mode<synchronous>, transform_indices = @transform_4, window_bounds = array<i64: 128, 128>}, {pipeline_mode = #tpu.pipeline_mode<synchronous>, transform_indices = @transform_5, window_bounds = array<i64: 1, 128>}, {pipeline_mode = #tpu.pipeline_mode<synchronous>, transform_indices = @transform_6, window_bounds = array<i64: 128, 128>}, {pipeline_mode = #tpu.pipeline_mode<synchronous>, transform_indices = @transform_7, window_bounds = array<i64: 1, 128>}, {transform_indices = @transform_8, window_bounds = array<i64: 128, 128>}]} {
    %c0 = arith.constant 0 : index
    %c0_0 = arith.constant 0 : index
    %0 = vector.load %arg2[%c0, %c0_0] : memref<128x16xf32, #tpu.memory_space<vmem>>, vector<128x16xf32>
    %1 = arith.truncf %0 : vector<128x16xf32> to vector<128x16xbf16>
    %c0_1 = arith.constant 0 : index
    %c0_2 = arith.constant 0 : index
    %2 = vector.load %arg3[%c0_1, %c0_2] : memref<16x128xbf16, #tpu.memory_space<vmem>>, vector<16x128xbf16>
    %cst = arith.constant dense<0.000000e+00> : vector<128x128xf32>
    %3 = tpu.matmul %1, %2, %cst {dimension_numbers = #tpu.dot_dimension_numbers<[1], [0], [0], [1], [0, 0, 1, 1], [], []>} : vector<128x16xbf16>, vector<16x128xbf16>, vector<128x128xf32> -> vector<128x128xf32>
    %c0_i32 = arith.constant 0 : i32
    %4 = arith.cmpi eq, %arg0, %c0_i32 : i32
    %c0_i32_3 = arith.constant 0 : i32
    %5 = arith.cmpi eq, %arg1, %c0_i32_3 : i32
    %6 = arith.andi %4, %5 : i1
    %7 = arith.extui %6 : i1 to i32
    %c0_i32_4 = arith.constant 0 : i32
    %8 = arith.cmpi ne, %7, %c0_i32_4 : i32
    scf.if %8 {
      %cst_8 = arith.constant 0.000000e+00 : f32
      %15 = vector.broadcast %cst_8 : f32 to vector<1x128xf32>
      %c0_9 = arith.constant 0 : index
      %c0_10 = arith.constant 0 : index
      %16 = vector.load %arg11[%c0_9, %c0_10] : memref<1x128xf32, #tpu.memory_space<vmem>>, vector<1x128xf32>
      tpu.vector_store %arg11[%c0_9, %c0_10], %15 {strides = array<i32>} : memref<1x128xf32, #tpu.memory_space<vmem>>, vector<1x128xf32>,
      %cst_11 = arith.constant 0.000000e+00 : f32
      %17 = vector.broadcast %cst_11 : f32 to vector<1x128xf32>
      %c0_12 = arith.constant 0 : index
      %c0_13 = arith.constant 0 : index
      %18 = vector.load %arg12[%c0_12, %c0_13] : memref<1x128xf32, #tpu.memory_space<vmem>>, vector<1x128xf32>
      tpu.vector_store %arg12[%c0_12, %c0_13], %17 {strides = array<i32>} : memref<1x128xf32, #tpu.memory_space<vmem>>, vector<1x128xf32>,
    } else {
    }
    %c0_i32_5 = arith.constant 0 : i32
    %9 = arith.cmpi eq, %arg0, %c0_i32_5 : i32
    %10 = arith.extui %9 : i1 to i32
    %c0_i32_6 = arith.constant 0 : i32
    %11 = arith.cmpi ne, %10, %c0_i32_6 : i32
    scf.if %11 {
      %c128_i32 = arith.constant 128 : i32
      %15 = arith.muli %arg1, %c128_i32 : i32
      %16 = tpu.iota {dimensions = array<i32: 0>} : vector<128x1xi32>
      %17 = vector.broadcast %15 : i32 to vector<128x1xi32>
      %18 = arith.addi %17, %16 : vector<128x1xi32>
      %c200_i32 = arith.constant 200 : i32
      %19 = vector.broadcast %c200_i32 : i32 to vector<128x1xi32>
      %20 = arith.cmpi slt, %18, %19 : vector<128x1xi32>
      %21 = arith.extui %20 : vector<128x1xi1> to vector<128x1xi32>
      %22 = arith.sitofp %21 : vector<128x1xi32> to vector<128x1xf32>
      %23 = vector.broadcast %22 : vector<128x1xf32> to vector<128x128xf32>
      %24 = arith.mulf %3, %23 : vector<128x128xf32>
      %c0_8 = arith.constant 0 : index
      %c0_9 = arith.constant 0 : index
      %25 = vector.load %arg11[%c0_8, %c0_9] : memref<1x128xf32, #tpu.memory_space<vmem>>, vector<1x128xf32>
      %cst_10 = arith.constant dense<0.000000e+00> : vector<128xf32>
      %26 = vector.multi_reduction <add>, %24, %cst_10 [0] : vector<128x128xf32> to vector<128xf32>
      %27 = vector.shape_cast %26 : vector<128xf32> to vector<1x128xf32>
      %28 = arith.addf %25, %27 : vector<1x128xf32>
      %c0_11 = arith.constant 0 : index
      %c0_12 = arith.constant 0 : index
      %29 = vector.load %arg11[%c0_11, %c0_12] : memref<1x128xf32, #tpu.memory_space<vmem>>, vector<1x128xf32>
      tpu.vector_store %arg11[%c0_11, %c0_12], %28 {strides = array<i32>} : memref<1x128xf32, #tpu.memory_space<vmem>>, vector<1x128xf32>,
      %c0_13 = arith.constant 0 : index
      %c0_14 = arith.constant 0 : index
      %30 = vector.load %arg12[%c0_13, %c0_14] : memref<1x128xf32, #tpu.memory_space<vmem>>, vector<1x128xf32>
      %31 = arith.mulf %24, %24 : vector<128x128xf32>
      %cst_15 = arith.constant dense<0.000000e+00> : vector<128xf32>
      %32 = vector.multi_reduction <add>, %31, %cst_15 [0] : vector<128x128xf32> to vector<128xf32>
      %33 = vector.shape_cast %32 : vector<128xf32> to vector<1x128xf32>
      %34 = arith.addf %30, %33 : vector<1x128xf32>
      %c0_16 = arith.constant 0 : index
      %c0_17 = arith.constant 0 : index
      %35 = vector.load %arg12[%c0_16, %c0_17] : memref<1x128xf32, #tpu.memory_space<vmem>>, vector<1x128xf32>
      tpu.vector_store %arg12[%c0_16, %c0_17], %34 {strides = array<i32>} : memref<1x128xf32, #tpu.memory_space<vmem>>, vector<1x128xf32>,
    } else {
    }
    %c1_i32 = arith.constant 1 : i32
    %12 = arith.cmpi eq, %arg0, %c1_i32 : i32
    %13 = arith.extui %12 : i1 to i32
    %c0_i32_7 = arith.constant 0 : i32
    %14 = arith.cmpi ne, %13, %c0_i32_7 : i32
    scf.if %14 {
      %c0_8 = arith.constant 0 : index
      %c0_9 = arith.constant 0 : index
      %15 = vector.load %arg11[%c0_8, %c0_9] : memref<1x128xf32, #tpu.memory_space<vmem>>, vector<1x128xf32>
      %cst_10 = arith.constant 5.000000e-03 : f32
      %16 = vector.broadcast %cst_10 : f32 to vector<1x128xf32>
      %17 = arith.mulf %15, %16 : vector<1x128xf32>
      %c0_11 = arith.constant 0 : index
      %c0_12 = arith.constant 0 : index
      %18 = vector.load %arg12[%c0_11, %c0_12] : memref<1x128xf32, #tpu.memory_space<vmem>>, vector<1x128xf32>
      %cst_13 = arith.constant 5.000000e-03 : f32
      %19 = vector.broadcast %cst_13 : f32 to vector<1x128xf32>
      %20 = arith.mulf %18, %19 : vector<1x128xf32>
      %21 = arith.mulf %17, %17 : vector<1x128xf32>
      %22 = arith.subf %20, %21 : vector<1x128xf32>
      %cst_14 = arith.constant 0.000000e+00 : f32
      %23 = vector.broadcast %cst_14 : f32 to vector<1x128xf32>
      %24 = arith.maximumf %22, %23 : vector<1x128xf32>
      %c0_15 = arith.constant 0 : index
      %c0_16 = arith.constant 0 : index
      %25 = vector.load %arg4[%c0_15, %c0_16] : memref<1x128xf32, #tpu.memory_space<vmem>>, vector<1x128xf32>
      %cst_17 = arith.constant 9.99999974E-6 : f32
      %26 = vector.broadcast %cst_17 : f32 to vector<1x128xf32>
      %27 = arith.addf %24, %26 : vector<1x128xf32>
      %28 = math.rsqrt %27 : vector<1x128xf32>
      %29 = arith.mulf %25, %28 : vector<1x128xf32>
      %30 = vector.broadcast %17 : vector<1x128xf32> to vector<128x128xf32>
      %31 = arith.subf %3, %30 : vector<128x128xf32>
      %32 = vector.broadcast %29 : vector<1x128xf32> to vector<128x128xf32>
      %33 = arith.mulf %31, %32 : vector<128x128xf32>
      %c0_18 = arith.constant 0 : index
      %c0_19 = arith.constant 0 : index
      %34 = vector.load %arg5[%c0_18, %c0_19] : memref<1x128xf32, #tpu.memory_space<vmem>>, vector<1x128xf32>
      %35 = vector.broadcast %34 : vector<1x128xf32> to vector<128x128xf32>
      %36 = arith.addf %33, %35 : vector<128x128xf32>
      %cst_20 = arith.constant 0.000000e+00 : f32
      %37 = vector.broadcast %cst_20 : f32 to vector<128x128xf32>
      %38 = arith.maximumf %36, %37 : vector<128x128xf32>
      %39 = arith.truncf %38 : vector<128x128xf32> to vector<128x128xbf16>
      %c0_21 = arith.constant 0 : index
      %c0_22 = arith.constant 0 : index
      %40 = vector.load %arg6[%c0_21, %c0_22] : memref<128x128xbf16, #tpu.memory_space<vmem>>, vector<128x128xbf16>
      %cst_23 = arith.constant dense<0.000000e+00> : vector<128x128xf32>
      %41 = tpu.matmul %39, %40, %cst_23 {dimension_numbers = #tpu.dot_dimension_numbers<[1], [0], [0], [1], [0, 0, 1, 1], [], []>} : vector<128x128xbf16>, vector<128x128xbf16>, vector<128x128xf32> -> vector<128x128xf32>
      %c0_24 = arith.constant 0 : index
      %c0_25 = arith.constant 0 : index
      %42 = vector.load %arg7[%c0_24, %c0_25] : memref<1x128xf32, #tpu.memory_space<vmem>>, vector<1x128xf32>
      %43 = vector.broadcast %42 : vector<1x128xf32> to vector<128x128xf32>
      %44 = arith.addf %41, %43 : vector<128x128xf32>
      %cst_26 = arith.constant 0.000000e+00 : f32
      %45 = vector.broadcast %cst_26 : f32 to vector<128x128xf32>
      %46 = arith.maximumf %44, %45 : vector<128x128xf32>
      %47 = arith.truncf %46 : vector<128x128xf32> to vector<128x128xbf16>
      %c0_27 = arith.constant 0 : index
      %c0_28 = arith.constant 0 : index
      %48 = vector.load %arg8[%c0_27, %c0_28] : memref<128x128xbf16, #tpu.memory_space<vmem>>, vector<128x128xbf16>
      %cst_29 = arith.constant dense<0.000000e+00> : vector<128x128xf32>
      %49 = tpu.matmul %47, %48, %cst_29 {dimension_numbers = #tpu.dot_dimension_numbers<[1], [0], [0], [1], [0, 0, 1, 1], [], []>} : vector<128x128xbf16>, vector<128x128xbf16>, vector<128x128xf32> -> vector<128x128xf32>
      %c0_30 = arith.constant 0 : index
      %c0_31 = arith.constant 0 : index
      %50 = vector.load %arg9[%c0_30, %c0_31] : memref<1x128xf32, #tpu.memory_space<vmem>>, vector<1x128xf32>
      %51 = vector.broadcast %50 : vector<1x128xf32> to vector<128x128xf32>
      %52 = arith.addf %49, %51 : vector<128x128xf32>
      %53 = math.tanh %52 : vector<128x128xf32>
      %c0_32 = arith.constant 0 : index
      %c0_33 = arith.constant 0 : index
      %54 = vector.load %arg10[%c0_32, %c0_33] : memref<128x128xf32, #tpu.memory_space<vmem>>, vector<128x128xf32>
      tpu.vector_store %arg10[%c0_32, %c0_33], %53 {strides = array<i32>} : memref<128x128xf32, #tpu.memory_space<vmem>>, vector<128x128xf32>,
    } else {
    }
    return
  }
  func.func @transform_0(%arg0: i32, %arg1: i32) -> (i32, i32) {
    %c0_i32 = arith.constant 0 : i32
    %c0_i32_0 = arith.constant 0 : i32
    return %arg1, %c0_i32 : i32, i32
  }
  func.func @transform_1(%arg0: i32, %arg1: i32) -> (i32, i32) {
    %c0_i32 = arith.constant 0 : i32
    %c0_i32_0 = arith.constant 0 : i32
    %c0_i32_1 = arith.constant 0 : i32
    return %c0_i32, %c0_i32_0 : i32, i32
  }
  func.func @transform_2(%arg0: i32, %arg1: i32) -> (i32, i32) {
    %c0_i32 = arith.constant 0 : i32
    %c0_i32_0 = arith.constant 0 : i32
    %c0_i32_1 = arith.constant 0 : i32
    return %c0_i32, %c0_i32_0 : i32, i32
  }
  func.func @transform_3(%arg0: i32, %arg1: i32) -> (i32, i32) {
    %c0_i32 = arith.constant 0 : i32
    %c0_i32_0 = arith.constant 0 : i32
    %c0_i32_1 = arith.constant 0 : i32
    return %c0_i32, %c0_i32_0 : i32, i32
  }
  func.func @transform_4(%arg0: i32, %arg1: i32) -> (i32, i32) {
    %c0_i32 = arith.constant 0 : i32
    %c0_i32_0 = arith.constant 0 : i32
    %c0_i32_1 = arith.constant 0 : i32
    return %c0_i32, %c0_i32_0 : i32, i32
  }
  func.func @transform_5(%arg0: i32, %arg1: i32) -> (i32, i32) {
    %c0_i32 = arith.constant 0 : i32
    %c0_i32_0 = arith.constant 0 : i32
    %c0_i32_1 = arith.constant 0 : i32
    return %c0_i32, %c0_i32_0 : i32, i32
  }
  func.func @transform_6(%arg0: i32, %arg1: i32) -> (i32, i32) {
    %c0_i32 = arith.constant 0 : i32
    %c0_i32_0 = arith.constant 0 : i32
    %c0_i32_1 = arith.constant 0 : i32
    return %c0_i32, %c0_i32_0 : i32, i32
  }
  func.func @transform_7(%arg0: i32, %arg1: i32) -> (i32, i32) {
    %c0_i32 = arith.constant 0 : i32
    %c0_i32_0 = arith.constant 0 : i32
    %c0_i32_1 = arith.constant 0 : i32
    return %c0_i32, %c0_i32_0 : i32, i32
  }
  func.func @transform_8(%arg0: i32, %arg1: i32) -> (i32, i32) {
    %0 = arith.muli %arg0, %arg1 : i32
    %c0_i32 = arith.constant 0 : i32
    %c0_i32_0 = arith.constant 0 : i32
    return %0, %c0_i32 : i32, i32
  }
}

</mosaic_0001>

<llo_original>
// kernel: actor_forward.1
$region0: #{actor_forward.1}
  #allocation0 [shape = 'u32[]', space=smem, size = 0x4, offset = 0x4, fixed_abs, tag = 'smem constant byte address 0x4 - core index']
  #allocation1 [shape = 'u32[144,128]{1,0:T(1,128)}', space=vmem, size = 0x12000, scoped, tag = 'internal scratch']
  #allocation2 [shape = 'f32[1,128]{1,0:T(1,128)}', space=vmem, size = 0x200, scoped, tag = 'scratch operand']
  #allocation3 [shape = 'f32[1,128]{1,0:T(1,128)}', space=vmem, size = 0x200, scoped, tag = 'scratch operand']
  %s0 = inlined_call_operand.vmem [shape: f32[256,16], index: 0, kind: input, shape index: {}]
  %s1 = inlined_call_operand.vmem [shape: bf16[16,128], index: 1, kind: input, shape index: {}]
  %s2 = inlined_call_operand.vmem [shape: f32[1,128], index: 2, kind: input, shape index: {}]
  %s3 = inlined_call_operand.vmem [shape: f32[1,128], index: 3, kind: input, shape index: {}]
  %s4 = inlined_call_operand.vmem [shape: bf16[128,128], index: 4, kind: input, shape index: {}]
  %s5 = inlined_call_operand.vmem [shape: f32[1,128], index: 5, kind: input, shape index: {}]
  %s6 = inlined_call_operand.vmem [shape: bf16[128,128], index: 6, kind: input, shape index: {}]
  %s7 = inlined_call_operand.vmem [shape: f32[1,128], index: 7, kind: input, shape index: {}]
  %s8 = inlined_call_operand.vmem [shape: f32[256,128], index: 8, kind: output, shape index: {}]
  %s9 = sld [smem:[#allocation0]]
  $region77: #{actor_forward.1} parent=0
    _
  %s11 = ssub.s32 1, %s9
  %s12 = scalar_select 0, %s11, %s9
  loop: start=0, step=1, limit=6
  $region2: #{actor_forward.1} parent=0 // loop_pre_header
    _
  $region3: #{actor_forward.1} parent=0 // loop_header
    %s14 = sphi 0, %s18
    %p15 = scmp.ge.s32.totalorder %s14, 6
    %s21 = sphi 0, %s33
    %s22 = sphi 0, %s29
    %s23 = sphi 0, %s21
    %s24 = sphi 0, %s22
    %s25 = sphi 0, %s23
    %s26 = sphi 0, %s24
    %s36 = sphi 0, %s38
    %s39 = sphi 0, %s36
    %s40 = sphi 0, %s39
    %s56 = sphi 0, %s40
    %s60 = sphi 0, %s60
    %s62 = sphi 0, %s60
    %s63 = sphi 0, %s62
    %s77 = sphi 0, %s63
    %s81 = sphi 0, %s81
    %s83 = sphi 0, %s81
    %s84 = sphi 0, %s83
    %s98 = sphi 0, %s84
    %s102 = sphi 0, %s102
    %s104 = sphi 0, %s102
    %s105 = sphi 0, %s104
    %s119 = sphi 0, %s105
    %s123 = sphi 0, %s123
    %s125 = sphi 0, %s123
    %s126 = sphi 0, %s125
    %s140 = sphi 0, %s126
    %s144 = sphi 0, %s144
    %s146 = sphi 0, %s144
    %s147 = sphi 0, %s146
    %s161 = sphi 0, %s147
    %s165 = sphi 0, %s165
    %s167 = sphi 0, %s165
    %s168 = sphi 0, %s167
    %s182 = sphi 0, %s168
    %s186 = sphi 0, %s186
    %s188 = sphi 0, %s186
    %s189 = sphi 0, %s188
    %s203 = sphi 0, %s189
    %s211 = sphi 0, %s213
    %s214 = sphi 0, %s211
    %s215 = sphi 0, %s214
    %s231 = sphi 0, %s215
  $region4: #{actor_forward.1} parent=0 // loop_header_branch
    %17 = sbr.rel (%p15) target = $region8
  $region5: #{actor_forward.1} parent=0 // loop_body
    %s19 = ssub.s32 %s14, 1
    %s20 = ssub.s32 %s14, 2
    %s27 = sadd.s32 1, %s22
    %p28 = scmp.ge.s32.totalorder %s27, 2
    %s29 = scalar_select %p28, 0, %s27
    %s30 = sadd.s32 1, %s21
    %s31 = scalar_select %p28, %s30, %s21
    %p32 = scmp.ge.s32.totalorder %s31, 2
    %s33 = scalar_select %p32, 0, %s31
    %s34 = ssub.s32 %s22, %s29
    %p35 = scmp.eq.s32.totalorder %s34, 0
    %s37 = sadd.s32 %s36, 1
    %s38 = scalar_select %p35, %s36, %s37
    %p41 = pneg %p35
    %p42 = scmp.eq.s32.totalorder %s14, 3
    %p43 = por %p41, %p42
    %p44 = scmp.ne.s32.totalorder %s36, %s39
    %p45 = scmp.eq.s32.totalorder %s14, 0
    %p46 = por %p44, %p45
    %p47 = scmp.ne.s32.totalorder %s36, %s39
    %p48 = scmp.eq.s32.totalorder %s19, 3
    %p49 = por %p47, %p48
    %p50 = scmp.ne.s32.totalorder %s39, %s40
    %p51 = scmp.eq.s32.totalorder %s19, 0
    %p52 = por %p50, %p51
    %p53 = scmp.ne.s32.totalorder %s39, %s40
    %p54 = scmp.eq.s32.totalorder %s20, 3
    %p55 = por %p53, %p54
    %p57 = scmp.ne.s32.totalorder %s40, %s56
    %p58 = scmp.eq.s32.totalorder %s20, 0
    %p59 = por %p57, %p58
    %s61 = sadd.s32 %s60, 1
    %p64 = scmp.eq.s32.totalorder %s14, 3
    %p65 = scmp.ne.s32.totalorder %s60, %s62
    %p66 = scmp.eq.s32.totalorder %s14, 0
    %p67 = por %p65, %p66
    %p68 = scmp.ne.s32.totalorder %s60, %s62
    %p69 = scmp.eq.s32.totalorder %s19, 3
    %p70 = por %p68, %p69
    %p71 = scmp.ne.s32.totalorder %s62, %s63
    %p72 = scmp.eq.s32.totalorder %s19, 0
    %p73 = por %p71, %p72
    %p74 = scmp.ne.s32.totalorder %s62, %s63
    %p75 = scmp.eq.s32.totalorder %s20, 3
    %p76 = por %p74, %p75
    %p78 = scmp.ne.s32.totalorder %s63, %s77
    %p79 = scmp.eq.s32.totalorder %s20, 0
    %p80 = por %p78, %p79
    %s82 = sadd.s32 %s81, 1
    %p85 = scmp.eq.s32.totalorder %s14, 3
    %p86 = scmp.ne.s32.totalorder %s81, %s83
    %p87 = scmp.eq.s32.totalorder %s14, 0
    %p88 = por %p86, %p87
    %p89 = scmp.ne.s32.totalorder %s81, %s83
    %p90 = scmp.eq.s32.totalorder %s19, 3
    %p91 = por %p89, %p90
    %p92 = scmp.ne.s32.totalorder %s83, %s84
    %p93 = scmp.eq.s32.totalorder %s19, 0
    %p94 = por %p92, %p93
    %p95 = scmp.ne.s32.totalorder %s83, %s84
    %p96 = scmp.eq.s32.totalorder %s20, 3
    %p97 = por %p95, %p96
    %p99 = scmp.ne.s32.totalorder %s84, %s98
    %p100 = scmp.eq.s32.totalorder %s20, 0
    %p101 = por %p99, %p100
    %s103 = sadd.s32 %s102, 1
    %p106 = scmp.eq.s32.totalorder %s14, 3
    %p107 = scmp.ne.s32.totalorder %s102, %s104
    %p108 = scmp.eq.s32.totalorder %s14, 0
    %p109 = por %p107, %p108
    %p110 = scmp.ne.s32.totalorder %s102, %s104
    %p111 = scmp.eq.s32.totalorder %s19, 3
    %p112 = por %p110, %p111
    %p113 = scmp.ne.s32.totalorder %s104, %s105
    %p114 = scmp.eq.s32.totalorder %s19, 0
    %p115 = por %p113, %p114
    %p116 = scmp.ne.s32.totalorder %s104, %s105
    %p117 = scmp.eq.s32.totalorder %s20, 3
    %p118 = por %p116, %p117
    %p120 = scmp.ne.s32.totalorder %s105, %s119
    %p121 = scmp.eq.s32.totalorder %s20, 0
    %p122 = por %p120, %p121
    %s124 = sadd.s32 %s123, 1
    %p127 = scmp.eq.s32.totalorder %s14, 3
    %p128 = scmp.ne.s32.totalorder %s123, %s125
    %p129 = scmp.eq.s32.totalorder %s14, 0
    %p130 = por %p128, %p129
    %p131 = scmp.ne.s32.totalorder %s123, %s125
    %p132 = scmp.eq.s32.totalorder %s19, 3
    %p133 = por %p131, %p132
    %p134 = scmp.ne.s32.totalorder %s125, %s126
    %p135 = scmp.eq.s32.totalorder %s19, 0
    %p136 = por %p134, %p135
    %p137 = scmp.ne.s32.totalorder %s125, %s126
    %p138 = scmp.eq.s32.totalorder %s20, 3
    %p139 = por %p137, %p138
    %p141 = scmp.ne.s32.totalorder %s126, %s140
    %p142 = scmp.eq.s32.totalorder %s20, 0
    %p143 = por %p141, %p142
    %s145 = sadd.s32 %s144, 1
    %p148 = scmp.eq.s32.totalorder %s14, 3
    %p149 = scmp.ne.s32.totalorder %s144, %s146
    %p150 = scmp.eq.s32.totalorder %s14, 0
    %p151 = por %p149, %p150
    %p152 = scmp.ne.s32.totalorder %s144, %s146
    %p153 = scmp.eq.s32.totalorder %s19, 3
    %p154 = por %p152, %p153
    %p155 = scmp.ne.s32.totalorder %s146, %s147
    %p156 = scmp.eq.s32.totalorder %s19, 0
    %p157 = por %p155, %p156
    %p158 = scmp.ne.s32.totalorder %s146, %s147
    %p159 = scmp.eq.s32.totalorder %s20, 3
    %p160 = por %p158, %p159
    %p162 = scmp.ne.s32.totalorder %s147, %s161
    %p163 = scmp.eq.s32.totalorder %s20, 0
    %p164 = por %p162, %p163
    %s166 = sadd.s32 %s165, 1
    %p169 = scmp.eq.s32.totalorder %s14, 3
    %p170 = scmp.ne.s32.totalorder %s165, %s167
    %p171 = scmp.eq.s32.totalorder %s14, 0
    %p172 = por %p170, %p171
    %p173 = scmp.ne.s32.totalorder %s165, %s167
    %p174 = scmp.eq.s32.totalorder %s19, 3
    %p175 = por %p173, %p174
    %p176 = scmp.ne.s32.totalorder %s167, %s168
    %p177 = scmp.eq.s32.totalorder %s19, 0
    %p178 = por %p176, %p177
    %p179 = scmp.ne.s32.totalorder %s167, %s168
    %p180 = scmp.eq.s32.totalorder %s20, 3
    %p181 = por %p179, %p180
    %p183 = scmp.ne.s32.totalorder %s168, %s182
    %p184 = scmp.eq.s32.totalorder %s20, 0
    %p185 = por %p183, %p184
    %s187 = sadd.s32 %s186, 1
    %p190 = scmp.eq.s32.totalorder %s14, 3
    %p191 = scmp.ne.s32.totalorder %s186, %s188
    %p192 = scmp.eq.s32.totalorder %s14, 0
    %p193 = por %p191, %p192
    %p194 = scmp.ne.s32.totalorder %s186, %s188
    %p195 = scmp.eq.s32.totalorder %s19, 3
    %p196 = por %p194, %p195
    %p197 = scmp.ne.s32.totalorder %s188, %s189
    %p198 = scmp.eq.s32.totalorder %s19, 0
    %p199 = por %p197, %p198
    %p200 = scmp.ne.s32.totalorder %s188, %s189
    %p201 = scmp.eq.s32.totalorder %s20, 3
    %p202 = por %p200, %p201
    %p204 = scmp.ne.s32.totalorder %s189, %s203
    %p205 = scmp.eq.s32.totalorder %s20, 0
    %p206 = por %p204, %p205
    %s207 = smul.u32 %s21, %s22
    %s208 = smul.u32 %s33, %s29
    %s209 = ssub.s32 %s207, %s208
    %p210 = scmp.eq.s32.totalorder %s209, 0
    %s212 = sadd.s32 %s211, 1
    %s213 = scalar_select %p210, %s211, %s212
    %p216 = pneg %p210
    %p217 = scmp.eq.s32.totalorder %s14, 3
    %p218 = por %p216, %p217
    %p219 = scmp.ne.s32.totalorder %s211, %s214
    %p220 = scmp.eq.s32.totalorder %s14, 0
    %p221 = por %p219, %p220
    %p222 = scmp.ne.s32.totalorder %s211, %s214
    %p223 = scmp.eq.s32.totalorder %s19, 3
    %p224 = por %p222, %p223
    %p225 = scmp.ne.s32.totalorder %s214, %s215
    %p226 = scmp.eq.s32.totalorder %s19, 0
    %p227 = por %p225, %p226
    %p228 = scmp.ne.s32.totalorder %s214, %s215
    %p229 = scmp.eq.s32.totalorder %s20, 3
    %p230 = por %p228, %p229
    %p232 = scmp.ne.s32.totalorder %s215, %s231
    %p233 = scmp.eq.s32.totalorder %s20, 0
    %p234 = por %p232, %p233
    %p235 = scmp.le.s32.totalorder 1, %s14
    %p236 = scmp.lt.s32.totalorder %s14, 5
    %p237 = pnand %p235, %p236
    %p238 = pneg %p237
    // Predicated region
    $region9: #{actor_forward.1} parent=5 // pred_check
      _
    $region10: #{actor_forward.1} parent=5 // pred_check_branch
      %240 = sbr.rel (%p237) target = $region12
    $region11: #{actor_forward.1} parent=5 // pred_region
      %s241 = ssub.s32 %s14, 1
      // Predicated region
      $region13: #{actor_forward.1} parent=11 // pred_check
        %p242 = pneg %p73
      $region14: #{actor_forward.1} parent=11 // pred_check_branch
        %244 = sbr.rel (%p242) target = $region16
      $region15: #{actor_forward.1} parent=11 // pred_region
        _
      $region16: #{actor_forward.1} parent=11 // pred_fallthru
        _
      // Predicated region
      $region17: #{actor_forward.1} parent=11 // pred_check
        %p245 = pneg %p94
      $region18: #{actor_forward.1} parent=11 // pred_check_branch
        %247 = sbr.rel (%p245) target = $region20
      $region19: #{actor_forward.1} parent=11 // pred_region
        _
      $region20: #{actor_forward.1} parent=11 // pred_fallthru
        _
      // Predicated region
      $region21: #{actor_forward.1} parent=11 // pred_check
        %p248 = pneg %p115
      $region22: #{actor_forward.1} parent=11 // pred_check_branch
        %250 = sbr.rel (%p248) target = $region24
      $region23: #{actor_forward.1} parent=11 // pred_region
        _
      $region24: #{actor_forward.1} parent=11 // pred_fallthru
        _
      // Predicated region
      $region25: #{actor_forward.1} parent=11 // pred_check
        %p251 = pneg %p136
      $region26: #{actor_forward.1} parent=11 // pred_check_branch
        %253 = sbr.rel (%p251) target = $region28
      $region27: #{actor_forward.1} parent=11 // pred_region
        _
      $region28: #{actor_forward.1} parent=11 // pred_fallthru
        _
      // Predicated region
      $region29: #{actor_forward.1} parent=11 // pred_check
        %p254 = pneg %p157
      $region30: #{actor_forward.1} parent=11 // pred_check_branch
        %256 = sbr.rel (%p254) target = $region32
      $region31: #{actor_forward.1} parent=11 // pred_region
        _
      $region32: #{actor_forward.1} parent=11 // pred_fallthru
        _
      // Predicated region
      $region33: #{actor_forward.1} parent=11 // pred_check
        %p257 = pneg %p178
      $region34: #{actor_forward.1} parent=11 // pred_check_branch
        %259 = sbr.rel (%p257) target = $region36
      $region35: #{actor_forward.1} parent=11 // pred_region
        _
      $region36: #{actor_forward.1} parent=11 // pred_fallthru
        _
      // Predicated region
      $region37: #{actor_forward.1} parent=11 // pred_check
        %p260 = pneg %p199
      $region38: #{actor_forward.1} parent=11 // pred_check_branch
        %262 = sbr.rel (%p260) target = $region40
      $region39: #{actor_forward.1} parent=11 // pred_region
        _
      $region40: #{actor_forward.1} parent=11 // pred_fallthru
        _
    $region12: #{actor_forward.1} parent=5 // pred_fallthru
      _
    %p263 = scmp.lt.s32.totalorder %s14, 4
    // Predicated region
    $region41: #{actor_forward.1} parent=5 // pred_check
      %p264 = pneg %p263
    $region42: #{actor_forward.1} parent=5 // pred_check_branch
      %266 = sbr.rel (%p264) target = $region44
    $region43: #{actor_forward.1} parent=5 // pred_region
      // Predicated region
      $region45: #{actor_forward.1} parent=43 // pred_check
        %p267 = pneg %p46
      $region46: #{actor_forward.1} parent=43 // pred_check_branch
        %269 = sbr.rel (%p267) target = $region48
      $region47: #{actor_forward.1} parent=43 // pred_region
        %s270 = smul.u32 16, %s22
        %p271 = scmp.lt.s32.totalorder %s270, 31
        %s272 = scalar_select %p271, %s270, 31
        %s273 = smul.addr %s272, 8
        %s274 = scalar_lea.vmem %s0, %s273
        %s275 = smul.u32 16, %s22
      $region48: #{actor_forward.1} parent=43 // pred_fallthru
        _
    $region44: #{actor_forward.1} parent=5 // pred_fallthru
      _
    %p276 = scmp.le.s32.totalorder 1, %s14
    %p277 = scmp.lt.s32.totalorder %s14, 5
    %p278 = pnand %p276, %p277
    %p279 = pneg %p278
    // Predicated region
    $region49: #{actor_forward.1} parent=5 // pred_check
      _
    $region50: #{actor_forward.1} parent=5 // pred_check_branch
      %281 = sbr.rel (%p278) target = $region52
    $region51: #{actor_forward.1} parent=5 // pred_region
      %s282 = ssub.s32 %s14, 1
      %s283 = smul.u32 16, %s24
      %p284 = scmp.lt.s32.totalorder %s283, 31
      %s285 = scalar_select %p284, %s283, 31
      %s286 = smul.addr %s285, 8
      %s287 = scalar_lea.vmem %s0, %s286
      %p288 = pneg %p52
      %p289 = pneg %p49
      %p290 = pneg %p73
      %p291 = pneg %p70
      %p292 = pneg %p94
      %p293 = pneg %p91
      %p294 = pneg %p115
      %p295 = pneg %p112
      %p296 = pneg %p136
      %p297 = pneg %p133
      %p298 = pneg %p157
      %p299 = pneg %p154
      %p300 = pneg %p178
      %p301 = pneg %p175
      %p302 = pneg %p199
      %p303 = pneg %p196
      %p304 = pneg %p227
      %p305 = pneg %p224
      %s306 = smul.u32 %s23, %s24
      %s307 = smul.u32 16, %s306
      %p308 = scmp.lt.s32.totalorder %s307, 31
      %s309 = scalar_select %p308, %s307, 31
      %s310 = smul.addr %s309, 8
      %s311 = scalar_lea.vmem %s8, %s310
      %s312 = smul.u32 16, %s24
      %p313 = scmp.lt.s32.totalorder %s312, 31
      %s314 = scalar_select %p313, %s312, 31
      %s315 = smul.addr %s314, 8
      %s316 = scalar_lea.vmem %s0, %s315
      %s317 = smul.u32 16, %s24
      %s318 = smul.u32 %s23, %s24
      %s319 = smul.u32 16, %s318
      %p320 = scmp.lt.s32.totalorder %s319, 31
      %s321 = scalar_select %p320, %s319, 31
      %s322 = smul.addr %s321, 8
      %s323 = scalar_lea.vmem %s8, %s322
      %s324 = smul.u32 %s23, %s24
      %s325 = smul.u32 16, %s324
      %v327 = vld [vmem:[%s316] sm:$0xff]
      %v328 = vld [vmem:[%s316 + $0x8] sm:$0xff]
      %v329 = vld [vmem:[%s316 + $0x10] sm:$0xff]
      %v330 = vld [vmem:[%s316 + $0x18] sm:$0xff]
      %v331 = vld [vmem:[%s316 + $0x20] sm:$0xff]
      %v332 = vld [vmem:[%s316 + $0x28] sm:$0xff]
      %v333 = vld [vmem:[%s316 + $0x30] sm:$0xff]
      %v334 = vld [vmem:[%s316 + $0x38] sm:$0xff]
      %v335 = vld [vmem:[%s316 + $0x40] sm:$0xff]
      %v336 = vld [vmem:[%s316 + $0x48] sm:$0xff]
      %v337 = vld [vmem:[%s316 + $0x50] sm:$0xff]
      %v338 = vld [vmem:[%s316 + $0x58] sm:$0xff]
      %v339 = vld [vmem:[%s316 + $0x60] sm:$0xff]
      %v340 = vld [vmem:[%s316 + $0x68] sm:$0xff]
      %v341 = vld [vmem:[%s316 + $0x70] sm:$0xff]
      %v342 = vld [vmem:[%s316 + $0x78] sm:$0xff]
      %v343 = vpack.c.bf16 %v328, %v327
      %v344 = vpack.c.bf16 %v330, %v329
      %v345 = vpack.c.bf16 %v332, %v331
      %v346 = vpack.c.bf16 %v334, %v333
      %v347 = vpack.c.bf16 %v336, %v335
      %v348 = vpack.c.bf16 %v338, %v337
      %v349 = vpack.c.bf16 %v340, %v339
      %v350 = vpack.c.bf16 %v342, %v341
      %v351 = vld [vmem:[%s1] sm:$0xf]
      %v352 = vld [vmem:[%s1 + $0x4] sm:$0xf]
      %v355 = vunpack.c.l.b16 %v351
      %v356 = vunpack.c.l.b16 %v352
      %v357 = vpack.c.b16 %v356, %v355
      %vm359 = vcmask 130048
      %v361 = vsel %vm359, %v343, 0
      %v364 = vsel %vm359, %v344, 0
      %v367 = vsel %vm359, %v345, 0
      %v370 = vsel %vm359, %v346, 0
      %v373 = vsel %vm359, %v347, 0
      %v376 = vsel %vm359, %v348, 0
      %v379 = vsel %vm359, %v349, 0
      %v382 = vsel %vm359, %v350, 0
      %384 = vmatprep.subr.bf16.mxu0 0
      %385 = vmatpush1.bf16.msra.mxu0 0
      %386 = vmatprep.subr.bf16.mxu0 0
      %387 = vmatpush1.bf16.msra.mxu0 0
      %388 = vmatprep.subr.bf16.mxu0 0
      %389 = vmatpush1.bf16.msra.mxu0 0
      %390 = vmatprep.subr.bf16.mxu0 0
      %391 = vmatpush1.bf16.msra.mxu0 0
      %392 = vmatprep.subr.bf16.mxu0 0
      %393 = vmatpush1.bf16.msra.mxu0 0
      %394 = vmatprep.subr.bf16.mxu0 0
      %395 = vmatpush1.bf16.msra.mxu0 0
      %396 = vmatprep.subr.bf16.mxu0 0
      %397 = vmatpush1.bf16.msra.mxu0 0
      %398 = vmatprep.subr.bf16.mxu0 0
      %399 = vmatpush1.bf16.msra.mxu0 %v357
      %400 = vmatprep.subr.bf16.mxu0 0
      %401 = vmatpush2.bf16.msra.mxu0 0
      %402 = vmatprep.subr.bf16.mxu0 0
      %403 = vmatpush2.bf16.msra.mxu0 0
      %404 = vmatprep.subr.bf16.mxu0 0
      %405 = vmatpush2.bf16.msra.mxu0 0
      %406 = vmatprep.subr.bf16.mxu0 0
      %407 = vmatpush2.bf16.msra.mxu0 0
      %408 = vmatprep.subr.bf16.mxu0 0
      %409 = vmatpush2.bf16.msra.mxu0 0
      %410 = vmatprep.subr.bf16.mxu0 0
      %411 = vmatpush2.bf16.msra.mxu0 0
      %412 = vmatprep.subr.bf16.mxu0 0
      %413 = vmatpush2.bf16.msra.mxu0 0
      %414 = vmatprep.subr.bf16.mxu0 0
      %415 = vmatpush2.bf16.msra.mxu0 0
      %416 = vmatprep.mubr.bf16.mxu0 0
      %417 = vmatmul.mubr.bf16.gmra.mxu0 %v361
      %v418 = vpop.f32.mrf.mxu0
      %v419 = vadd.f32 0.0, %v418
      %v420 = vpop.f32.mrf.mxu0
      %v421 = vpop.f32.mrf.mxu0
      %v422 = vadd.f32 0.0, %v421
      %v423 = vpop.f32.mrf.mxu0
      %424 = vmatprep.mubr.bf16.mxu0 0
      %425 = vmatmul.mubr.bf16.gmra.mxu0 %v364
      %v426 = vpop.f32.mrf.mxu0
      %v427 = vadd.f32 0.0, %v426
      %v428 = vpop.f32.mrf.mxu0
      %v429 = vpop.f32.mrf.mxu0
      %v430 = vadd.f32 0.0, %v429
      %v431 = vpop.f32.mrf.mxu0
      %432 = vmatprep.mubr.bf16.mxu0 0
      %433 = vmatmul.mubr.bf16.gmra.mxu0 %v367
      %v434 = vpop.f32.mrf.mxu0
      %v435 = vadd.f32 0.0, %v434
      %v436 = vpop.f32.mrf.mxu0
      %v437 = vpop.f32.mrf.mxu0
      %v438 = vadd.f32 0.0, %v437
      %v439 = vpop.f32.mrf.mxu0
      %440 = vmatprep.mubr.bf16.mxu0 0
      %441 = vmatmul.mubr.bf16.gmra.mxu0 %v370
      %v442 = vpop.f32.mrf.mxu0
      %v443 = vadd.f32 0.0, %v442
      %v444 = vpop.f32.mrf.mxu0
      %v445 = vpop.f32.mrf.mxu0
      %v446 = vadd.f32 0.0, %v445
      %v447 = vpop.f32.mrf.mxu0
      %448 = vmatprep.mubr.bf16.mxu0 0
      %449 = vmatmul.mubr.bf16.gmra.mxu0 %v373
      %v450 = vpop.f32.mrf.mxu0
      %v451 = vadd.f32 0.0, %v450
      %v452 = vpop.f32.mrf.mxu0
      %v453 = vpop.f32.mrf.mxu0
      %v454 = vadd.f32 0.0, %v453
      %v455 = vpop.f32.mrf.mxu0
      %456 = vmatprep.mubr.bf16.mxu0 0
      %457 = vmatmul.mubr.bf16.gmra.mxu0 %v376
      %v458 = vpop.f32.mrf.mxu0
      %v459 = vadd.f32 0.0, %v458
      %v460 = vpop.f32.mrf.mxu0
      %v461 = vpop.f32.mrf.mxu0
      %v462 = vadd.f32 0.0, %v461
      %v463 = vpop.f32.mrf.mxu0
      %464 = vmatprep.mubr.bf16.mxu0 0
      %465 = vmatmul.mubr.bf16.gmra.mxu0 %v379
      %v466 = vpop.f32.mrf.mxu0
      %v467 = vadd.f32 0.0, %v466
      %v468 = vpop.f32.mrf.mxu0
      %v469 = vpop.f32.mrf.mxu0
      %v470 = vadd.f32 0.0, %v469
      %v471 = vpop.f32.mrf.mxu0
      %472 = vmatprep.mubr.bf16.mxu0 0
      %473 = vmatmul.mubr.bf16.gmra.mxu0 %v382
      %v474 = vpop.f32.mrf.mxu0
      %v475 = vadd.f32 0.0, %v474
      %v476 = vpop.f32.mrf.mxu0
      %v477 = vpop.f32.mrf.mxu0
      %v478 = vadd.f32 0.0, %v477
      %v479 = vpop.f32.mrf.mxu0
      %480 = vdwg.mxu0
      %p481 = scmp.eq.s32.totalorder %s23, 0
      %p482 = scmp.eq.s32.totalorder %s24, 0
      %p483 = pnand %p481, %p482
      %p484 = pneg %p483
      // Predicated region
      $region53: #{actor_forward.1} parent=51 // pred_check
        _
      $region54: #{actor_forward.1} parent=51 // pred_check_branch
        %486 = sbr.rel (%p483) target = $region56
      $region55: #{actor_forward.1} parent=51 // pred_region
        %487 = vst [vmem:[#allocation2] sm:$0x1] 0.0
        %488 = vst [vmem:[#allocation3] sm:$0x1] 0.0
      $region56: #{actor_forward.1} parent=51 // pred_fallthru
        _
      // Predicated region
      $region57: #{actor_forward.1} parent=51 // pred_check
        %p489 = pneg %p481
      $region58: #{actor_forward.1} parent=51 // pred_check_branch
        %491 = sbr.rel (%p489) target = $region60
      $region59: #{actor_forward.1} parent=51 // pred_region
        %s492 = smul.u32 %s24, 128
        %v493 = vlaneseq
        %v494 = vshrl.u32 %v493, 7
        %v495 = vadd.s32 %v494, 8
        %v496 = vadd.s32 %v494, 16
        %v497 = vadd.s32 %v494, 24
        %v498 = vadd.s32 %v494, 32
        %v499 = vadd.s32 %v494, 40
        %v500 = vadd.s32 %v494, 48
        %v501 = vadd.s32 %v494, 56
        %v502 = vadd.s32 %v494, 64
        %v503 = vadd.s32 %v494, 72
        %v504 = vadd.s32 %v494, 80
        %v505 = vadd.s32 %v494, 88
        %v506 = vadd.s32 %v494, 96
        %v507 = vadd.s32 %v494, 104
        %v508 = vadd.s32 %v494, 112
        %v509 = vadd.s32 %v494, 120
        %v510 = vstv %s492
        %v511 = vadd.s32 %v510, %v494
        %v512 = vadd.s32 %v510, %v495
        %v513 = vadd.s32 %v510, %v496
        %v514 = vadd.s32 %v510, %v497
        %v515 = vadd.s32 %v510, %v498
        %v516 = vadd.s32 %v510, %v499
        %v517 = vadd.s32 %v510, %v500
        %v518 = vadd.s32 %v510, %v501
        %v519 = vadd.s32 %v510, %v502
        %v520 = vadd.s32 %v510, %v503
        %v521 = vadd.s32 %v510, %v504
        %v522 = vadd.s32 %v510, %v505
        %v523 = vadd.s32 %v510, %v506
        %v524 = vadd.s32 %v510, %v507
        %v525 = vadd.s32 %v510, %v508
        %v526 = vadd.s32 %v510, %v509
        %vm527 = vcmp.lt.s32.totalorder %v511, 200
        %vm528 = vcmp.lt.s32.totalorder %v512, 200
        %vm529 = vcmp.lt.s32.totalorder %v513, 200
        %vm530 = vcmp.lt.s32.totalorder %v514, 200
        %vm531 = vcmp.lt.s32.totalorder %v515, 200
        %vm532 = vcmp.lt.s32.totalorder %v516, 200
        %vm533 = vcmp.lt.s32.totalorder %v517, 200
        %vm534 = vcmp.lt.s32.totalorder %v518, 200
        %vm535 = vcmp.lt.s32.totalorder %v519, 200
        %vm536 = vcmp.lt.s32.totalorder %v520, 200
        %vm537 = vcmp.lt.s32.totalorder %v521, 200
        %vm538 = vcmp.lt.s32.totalorder %v522, 200
        %vm539 = vcmp.lt.s32.totalorder %v523, 200
        %vm540 = vcmp.lt.s32.totalorder %v524, 200
        %vm541 = vcmp.lt.s32.totalorder %v525, 200
        %vm542 = vcmp.lt.s32.totalorder %v526, 200
        %v543 = vsel %vm527, 1, 0
        %v544 = vsel %vm528, 1, 0
        %v545 = vsel %vm529, 1, 0
        %v546 = vsel %vm530, 1, 0
        %v547 = vsel %vm531, 1, 0
        %v548 = vsel %vm532, 1, 0
        %v549 = vsel %vm533, 1, 0
        %v550 = vsel %vm534, 1, 0
        %v551 = vsel %vm535, 1, 0
        %v552 = vsel %vm536, 1, 0
        %v553 = vsel %vm537, 1, 0
        %v554 = vsel %vm538, 1, 0
        %v555 = vsel %vm539, 1, 0
        %v556 = vsel %vm540, 1, 0
        %v557 = vsel %vm541, 1, 0
        %v558 = vsel %vm542, 1, 0
        %v559 = vcvt.s32.f32 %v543
        %v560 = vcvt.s32.f32 %v544
        %v561 = vcvt.s32.f32 %v545
        %v562 = vcvt.s32.f32 %v546
        %v563 = vcvt.s32.f32 %v547
        %v564 = vcvt.s32.f32 %v548
        %v565 = vcvt.s32.f32 %v549
        %v566 = vcvt.s32.f32 %v550
        %v567 = vcvt.s32.f32 %v551
        %v568 = vcvt.s32.f32 %v552
        %v569 = vcvt.s32.f32 %v553
        %v570 = vcvt.s32.f32 %v554
        %v571 = vcvt.s32.f32 %v555
        %v572 = vcvt.s32.f32 %v556
        %v573 = vcvt.s32.f32 %v557
        %v574 = vcvt.s32.f32 %v558
        %v575 = vmul.f32 %v419, %v559
        %v576 = vmul.f32 %v422, %v560
        %v577 = vmul.f32 %v427, %v561
        %v578 = vmul.f32 %v430, %v562
        %v579 = vmul.f32 %v435, %v563
        %v580 = vmul.f32 %v438, %v564
        %v581 = vmul.f32 %v443, %v565
        %v582 = vmul.f32 %v446, %v566
        %v583 = vmul.f32 %v451, %v567
        %v584 = vmul.f32 %v454, %v568
        %v585 = vmul.f32 %v459, %v569
        %v586 = vmul.f32 %v462, %v570
        %v587 = vmul.f32 %v467, %v571
        %v588 = vmul.f32 %v470, %v572
        %v589 = vmul.f32 %v475, %v573
        %v590 = vmul.f32 %v478, %v574
        %v591 = vld [vmem:[#allocation2] sm:$0x1]
        %v592 = vadd.f32 %v575, %v576
        %v593 = vadd.f32 %v592, %v577
        %v594 = vadd.f32 %v593, %v578
        %v595 = vadd.f32 %v594, %v579
        %v596 = vadd.f32 %v595, %v580
        %v597 = vadd.f32 %v596, %v581
        %v598 = vadd.f32 %v597, %v582
        %v599 = vadd.f32 %v598, %v583
        %v600 = vadd.f32 %v599, %v584
        %v601 = vadd.f32 %v600, %v585
        %v602 = vadd.f32 %v601, %v586
        %v603 = vadd.f32 %v602, %v587
        %v604 = vadd.f32 %v603, %v588
        %v605 = vadd.f32 %v604, %v589
        %v606 = vadd.f32 %v605, %v590
        %v607 = vrot.slane %v606, 4
        %v608 = vadd.f32 %v606, %v607
        %v609 = vrot.slane %v608, 2
        %v610 = vadd.f32 %v608, %v609
        %v611 = vrot.slane %v610, 1
        %v612 = vadd.f32 %v610, %v611
        %v613 = vadd.f32 %v591, %v612
        %614 = vst [vmem:[#allocation2] sm:$0x1] %v613
        %v615 = vld [vmem:[#allocation3] sm:$0x1]
        %v616 = vmul.f32 %v575, %v575
        %v617 = vmul.f32 %v576, %v576
        %v618 = vmul.f32 %v577, %v577
        %v619 = vmul.f32 %v578, %v578
        %v620 = vmul.f32 %v579, %v579
        %v621 = vmul.f32 %v580, %v580
        %v622 = vmul.f32 %v581, %v581
        %v623 = vmul.f32 %v582, %v582
        %v624 = vmul.f32 %v583, %v583
        %v625 = vmul.f32 %v584, %v584
        %v626 = vmul.f32 %v585, %v585
        %v627 = vmul.f32 %v586, %v586
        %v628 = vmul.f32 %v587, %v587
        %v629 = vmul.f32 %v588, %v588
        %v630 = vmul.f32 %v589, %v589
        %v631 = vmul.f32 %v590, %v590
        %v632 = vadd.f32 %v616, %v617
        %v633 = vadd.f32 %v632, %v618
        %v634 = vadd.f32 %v633, %v619
        %v635 = vadd.f32 %v634, %v620
        %v636 = vadd.f32 %v635, %v621
        %v637 = vadd.f32 %v636, %v622
        %v638 = vadd.f32 %v637, %v623
        %v639 = vadd.f32 %v638, %v624
        %v640 = vadd.f32 %v639, %v625
        %v641 = vadd.f32 %v640, %v626
        %v642 = vadd.f32 %v641, %v627
        %v643 = vadd.f32 %v642, %v628
        %v644 = vadd.f32 %v643, %v629
        %v645 = vadd.f32 %v644, %v630
        %v646 = vadd.f32 %v645, %v631
        %v647 = vrot.slane %v646, 4
        %v648 = vadd.f32 %v646, %v647
        %v649 = vrot.slane %v648, 2
        %v650 = vadd.f32 %v648, %v649
        %v651 = vrot.slane %v650, 1
        %v652 = vadd.f32 %v650, %v651
        %v653 = vadd.f32 %v615, %v652
        %654 = vst [vmem:[#allocation3] sm:$0x1] %v653
      $region60: #{actor_forward.1} parent=51 // pred_fallthru
        _
      %p655 = scmp.eq.s32.totalorder %s23, 1
      // Predicated region
      $region61: #{actor_forward.1} parent=51 // pred_check
        %p656 = pneg %p655
      $region62: #{actor_forward.1} parent=51 // pred_check_branch
        %658 = sbr.rel (%p656) target = $region64
      $region63: #{actor_forward.1} parent=51 // pred_region
        %v659 = vld [vmem:[#allocation2] sm:$0x1]
        %v660 = vmul.f32 %v659, 0.005
        %v661 = vld [vmem:[#allocation3] sm:$0x1]
        %v662 = vmul.f32 %v661, 0.005
        %v663 = vmul.f32 %v660, %v660
        %v664 = vsub.f32 %v662, %v663
        %v665 = vmax.f32 %v664, 0.0
        %v666 = vld [vmem:[%s2] sm:$0x1]
        %v667 = vadd.f32 %v665, 1e-05
        %v668 = vrsqrt.pop %v667
        %v669 = vmul.f32 %v666, %v668
        %v671 = vlaneseq
        %v672 = vshrl.u32 %v671, 7
        %v673 = vsub.s32 0, %v672
        %v674 = vrot.slane %v660, %v673
        %v676 = vsub.f32 %v419, %v674
        %v677 = vsub.f32 %v422, %v674
        %v678 = vsub.f32 %v427, %v674
        %v679 = vsub.f32 %v430, %v674
        %v680 = vsub.f32 %v435, %v674
        %v681 = vsub.f32 %v438, %v674
        %v682 = vsub.f32 %v443, %v674
        %v683 = vsub.f32 %v446, %v674
        %v684 = vsub.f32 %v451, %v674
        %v685 = vsub.f32 %v454, %v674
        %v686 = vsub.f32 %v459, %v674
        %v687 = vsub.f32 %v462, %v674
        %v688 = vsub.f32 %v467, %v674
        %v689 = vsub.f32 %v470, %v674
        %v690 = vsub.f32 %v475, %v674
        %v691 = vsub.f32 %v478, %v674
        %v693 = vlaneseq
        %v694 = vshrl.u32 %v693, 7
        %v695 = vsub.s32 0, %v694
        %v696 = vrot.slane %v669, %v695
        %v698 = vmul.f32 %v676, %v696
        %v699 = vmul.f32 %v677, %v696
        %v700 = vmul.f32 %v678, %v696
        %v701 = vmul.f32 %v679, %v696
        %v702 = vmul.f32 %v680, %v696
        %v703 = vmul.f32 %v681, %v696
        %v704 = vmul.f32 %v682, %v696
        %v705 = vmul.f32 %v683, %v696
        %v706 = vmul.f32 %v684, %v696
        %v707 = vmul.f32 %v685, %v696
        %v708 = vmul.f32 %v686, %v696
        %v709 = vmul.f32 %v687, %v696
        %v710 = vmul.f32 %v688, %v696
        %v711 = vmul.f32 %v689, %v696
        %v712 = vmul.f32 %v690, %v696
        %v713 = vmul.f32 %v691, %v696
        %v714 = vld [vmem:[%s3] sm:$0x1]
        %v716 = vlaneseq
        %v717 = vshrl.u32 %v716, 7
        %v718 = vsub.s32 0, %v717
        %v719 = vrot.slane %v714, %v718
        %v721 = vadd.f32 %v698, %v719
        %v722 = vadd.f32 %v699, %v719
        %v723 = vadd.f32 %v700, %v719
        %v724 = vadd.f32 %v701, %v719
        %v725 = vadd.f32 %v702, %v719
        %v726 = vadd.f32 %v703, %v719
        %v727 = vadd.f32 %v704, %v719
        %v728 = vadd.f32 %v705, %v719
        %v729 = vadd.f32 %v706, %v719
        %v730 = vadd.f32 %v707, %v719
        %v731 = vadd.f32 %v708, %v719
        %v732 = vadd.f32 %v709, %v719
        %v733 = vadd.f32 %v710, %v719
        %v734 = vadd.f32 %v711, %v719
        %v735 = vadd.f32 %v712, %v719
        %v736 = vadd.f32 %v713, %v719
        %v737 = vmax.f32 %v721, 0.0
        %v738 = vmax.f32 %v722, 0.0
        %v739 = vmax.f32 %v723, 0.0
        %v740 = vmax.f32 %v724, 0.0
        %v741 = vmax.f32 %v725, 0.0
        %v742 = vmax.f32 %v726, 0.0
        %v743 = vmax.f32 %v727, 0.0
        %v744 = vmax.f32 %v728, 0.0
        %v745 = vmax.f32 %v729, 0.0
        %v746 = vmax.f32 %v730, 0.0
        %v747 = vmax.f32 %v731, 0.0
        %v748 = vmax.f32 %v732, 0.0
        %v749 = vmax.f32 %v733, 0.0
        %v750 = vmax.f32 %v734, 0.0
        %v751 = vmax.f32 %v735, 0.0
        %v752 = vmax.f32 %v736, 0.0
        %v753 = vpack.c.bf16 %v738, %v737
        %v754 = vpack.c.bf16 %v740, %v739
        %v755 = vpack.c.bf16 %v742, %v741
        %v756 = vpack.c.bf16 %v744, %v743
        %v757 = vpack.c.bf16 %v746, %v745
        %v758 = vpack.c.bf16 %v748, %v747
        %v759 = vpack.c.bf16 %v750, %v749
        %v760 = vpack.c.bf16 %v752, %v751
        %v761 = vld [vmem:[%s4] sm:$0xf]
        %v762 = vld [vmem:[%s4 + $0x4] sm:$0xf]
        %v763 = vld [vmem:[%s4 + $0x8] sm:$0xf]
        %v764 = vld [vmem:[%s4 + $0xc] sm:$0xf]
        %v765 = vld [vmem:[%s4 + $0x10] sm:$0xf]
        %v766 = vld [vmem:[%s4 + $0x14] sm:$0xf]
        %v767 = vld [vmem:[%s4 + $0x18] sm:$0xf]
        %v768 = vld [vmem:[%s4 + $0x1c] sm:$0xf]
        %v769 = vld [vmem:[%s4 + $0x20] sm:$0xf]
        %v770 = vld [vmem:[%s4 + $0x24] sm:$0xf]
        %v771 = vld [vmem:[%s4 + $0x28] sm:$0xf]
        %v772 = vld [vmem:[%s4 + $0x2c] sm:$0xf]
        %v773 = vld [vmem:[%s4 + $0x30] sm:$0xf]
        %v774 = vld [vmem:[%s4 + $0x34] sm:$0xf]
        %v775 = vld [vmem:[%s4 + $0x38] sm:$0xf]
        %v776 = vld [vmem:[%s4 + $0x3c] sm:$0xf]
        %v777 = vld [vmem:[%s5] sm:$0x1]
        %v779 = vlaneseq
        %v780 = vshrl.u32 %v779, 7
        %v781 = vsub.s32 0, %v780
        %v782 = vrot.slane %v777, %v781
        %v800 = vunpack.c.l.b16 %v761
        %v801 = vunpack.c.l.b16 %v762
        %v802 = vunpack.c.l.b16 %v763
        %v803 = vunpack.c.l.b16 %v764
        %v804 = vunpack.c.l.b16 %v765
        %v805 = vunpack.c.l.b16 %v766
        %v806 = vunpack.c.l.b16 %v767
        %v807 = vunpack.c.l.b16 %v768
        %v808 = vunpack.c.l.b16 %v769
        %v809 = vunpack.c.l.b16 %v770
        %v810 = vunpack.c.l.b16 %v771
        %v811 = vunpack.c.l.b16 %v772
        %v812 = vunpack.c.l.b16 %v773
        %v813 = vunpack.c.l.b16 %v774
        %v814 = vunpack.c.l.b16 %v775
        %v815 = vunpack.c.l.b16 %v776
        %v816 = vpack.c.b16 %v801, %v800
        %v817 = vpack.c.b16 %v803, %v802
        %v818 = vpack.c.b16 %v805, %v804
        %v819 = vpack.c.b16 %v807, %v806
        %v820 = vpack.c.b16 %v809, %v808
        %v821 = vpack.c.b16 %v811, %v810
        %v822 = vpack.c.b16 %v813, %v812
        %v823 = vpack.c.b16 %v815, %v814
        %832 = vmatprep.subr.bf16.mxu0 0
        %833 = vmatpush1.bf16.msra.mxu0 %v823
        %834 = vmatprep.subr.bf16.mxu0 0
        %835 = vmatpush1.bf16.msra.mxu0 %v822
        %836 = vmatprep.subr.bf16.mxu0 0
        %837 = vmatpush1.bf16.msra.mxu0 %v821
        %838 = vmatprep.subr.bf16.mxu0 0
        %839 = vmatpush1.bf16.msra.mxu0 %v820
        %840 = vmatprep.subr.bf16.mxu0 0
        %841 = vmatpush1.bf16.msra.mxu0 %v819
        %842 = vmatprep.subr.bf16.mxu0 0
        %843 = vmatpush1.bf16.msra.mxu0 %v818
        %844 = vmatprep.subr.bf16.mxu0 0
        %845 = vmatpush1.bf16.msra.mxu0 %v817
        %846 = vmatprep.subr.bf16.mxu0 0
        %847 = vmatpush1.bf16.msra.mxu0 %v816
        %848 = vmatprep.subr.bf16.mxu0 0
        %849 = vmatpush2.bf16.msra.mxu0 0
        %850 = vmatprep.subr.bf16.mxu0 0
        %851 = vmatpush2.bf16.msra.mxu0 0
        %852 = vmatprep.subr.bf16.mxu0 0
        %853 = vmatpush2.bf16.msra.mxu0 0
        %854 = vmatprep.subr.bf16.mxu0 0
        %855 = vmatpush2.bf16.msra.mxu0 0
        %856 = vmatprep.subr.bf16.mxu0 0
        %857 = vmatpush2.bf16.msra.mxu0 0
        %858 = vmatprep.subr.bf16.mxu0 0
        %859 = vmatpush2.bf16.msra.mxu0 0
        %860 = vmatprep.subr.bf16.mxu0 0
        %861 = vmatpush2.bf16.msra.mxu0 0
        %862 = vmatprep.subr.bf16.mxu0 0
        %863 = vmatpush2.bf16.msra.mxu0 0
        %864 = vmatprep.mubr.bf16.mxu0 0
        %865 = vmatmul.mubr.bf16.gmra.mxu0 %v753
        %v866 = vpop.f32.mrf.mxu0
        %v867 = vadd.f32 %v782, %v866
        %v868 = vpop.f32.mrf.mxu0
        %v869 = vpop.f32.mrf.mxu0
        %v870 = vadd.f32 %v782, %v869
        %v871 = vpop.f32.mrf.mxu0
        %872 = vmatprep.mubr.bf16.mxu0 0
        %873 = vmatmul.mubr.bf16.gmra.mxu0 %v754
        %v874 = vpop.f32.mrf.mxu0
        %v875 = vadd.f32 %v782, %v874
        %v876 = vpop.f32.mrf.mxu0
        %v877 = vpop.f32.mrf.mxu0
        %v878 = vadd.f32 %v782, %v877
        %v879 = vpop.f32.mrf.mxu0
        %880 = vmatprep.mubr.bf16.mxu0 0
        %881 = vmatmul.mubr.bf16.gmra.mxu0 %v755
        %v882 = vpop.f32.mrf.mxu0
        %v883 = vadd.f32 %v782, %v882
        %v884 = vpop.f32.mrf.mxu0
        %v885 = vpop.f32.mrf.mxu0
        %v886 = vadd.f32 %v782, %v885
        %v887 = vpop.f32.mrf.mxu0
        %888 = vmatprep.mubr.bf16.mxu0 0
        %889 = vmatmul.mubr.bf16.gmra.mxu0 %v756
        %v890 = vpop.f32.mrf.mxu0
        %v891 = vadd.f32 %v782, %v890
        %v892 = vpop.f32.mrf.mxu0
        %v893 = vpop.f32.mrf.mxu0
        %v894 = vadd.f32 %v782, %v893
        %v895 = vpop.f32.mrf.mxu0
        %896 = vmatprep.mubr.bf16.mxu0 0
        %897 = vmatmul.mubr.bf16.gmra.mxu0 %v757
        %v898 = vpop.f32.mrf.mxu0
        %v899 = vadd.f32 %v782, %v898
        %v900 = vpop.f32.mrf.mxu0
        %v901 = vpop.f32.mrf.mxu0
        %v902 = vadd.f32 %v782, %v901
        %v903 = vpop.f32.mrf.mxu0
        %904 = vmatprep.mubr.bf16.mxu0 0
        %905 = vmatmul.mubr.bf16.gmra.mxu0 %v758
        %v906 = vpop.f32.mrf.mxu0
        %v907 = vadd.f32 %v782, %v906
        %v908 = vpop.f32.mrf.mxu0
        %v909 = vpop.f32.mrf.mxu0
        %v910 = vadd.f32 %v782, %v909
        %v911 = vpop.f32.mrf.mxu0
        %912 = vmatprep.mubr.bf16.mxu0 0
        %913 = vmatmul.mubr.bf16.gmra.mxu0 %v759
        %v914 = vpop.f32.mrf.mxu0
        %v915 = vadd.f32 %v782, %v914
        %v916 = vpop.f32.mrf.mxu0
        %v917 = vpop.f32.mrf.mxu0
        %v918 = vadd.f32 %v782, %v917
        %v919 = vpop.f32.mrf.mxu0
        %920 = vmatprep.mubr.bf16.mxu0 0
        %921 = vmatmul.mubr.bf16.gmra.mxu0 %v760
        %v922 = vpop.f32.mrf.mxu0
        %v923 = vadd.f32 %v782, %v922
        %v924 = vpop.f32.mrf.mxu0
        %v925 = vpop.f32.mrf.mxu0
        %v926 = vadd.f32 %v782, %v925
        %v927 = vpop.f32.mrf.mxu0
        %928 = vdwg.mxu0
        %v929 = vmax.f32 %v867, 0.0
        %v930 = vmax.f32 %v870, 0.0
        %v931 = vmax.f32 %v875, 0.0
        %v932 = vmax.f32 %v878, 0.0
        %v933 = vmax.f32 %v883, 0.0
        %v934 = vmax.f32 %v886, 0.0
        %v935 = vmax.f32 %v891, 0.0
        %v936 = vmax.f32 %v894, 0.0
        %v937 = vmax.f32 %v899, 0.0
        %v938 = vmax.f32 %v902, 0.0
        %v939 = vmax.f32 %v907, 0.0
        %v940 = vmax.f32 %v910, 0.0
        %v941 = vmax.f32 %v915, 0.0
        %v942 = vmax.f32 %v918, 0.0
        %v943 = vmax.f32 %v923, 0.0
        %v944 = vmax.f32 %v926, 0.0
        %v945 = vpack.c.bf16 %v930, %v929
        %v946 = vpack.c.bf16 %v932, %v931
        %v947 = vpack.c.bf16 %v934, %v933
        %v948 = vpack.c.bf16 %v936, %v935
        %v949 = vpack.c.bf16 %v938, %v937
        %v950 = vpack.c.bf16 %v940, %v939
        %v951 = vpack.c.bf16 %v942, %v941
        %v952 = vpack.c.bf16 %v944, %v943
        %v953 = vld [vmem:[%s6] sm:$0xf]
        %v954 = vld [vmem:[%s6 + $0x4] sm:$0xf]
        %v955 = vld [vmem:[%s6 + $0x8] sm:$0xf]
        %v956 = vld [vmem:[%s6 + $0xc] sm:$0xf]
        %v957 = vld [vmem:[%s6 + $0x10] sm:$0xf]
        %v958 = vld [vmem:[%s6 + $0x14] sm:$0xf]
        %v959 = vld [vmem:[%s6 + $0x18] sm:$0xf]
        %v960 = vld [vmem:[%s6 + $0x1c] sm:$0xf]
        %v961 = vld [vmem:[%s6 + $0x20] sm:$0xf]
        %v962 = vld [vmem:[%s6 + $0x24] sm:$0xf]
        %v963 = vld [vmem:[%s6 + $0x28] sm:$0xf]
        %v964 = vld [vmem:[%s6 + $0x2c] sm:$0xf]
        %v965 = vld [vmem:[%s6 + $0x30] sm:$0xf]
        %v966 = vld [vmem:[%s6 + $0x34] sm:$0xf]
        %v967 = vld [vmem:[%s6 + $0x38] sm:$0xf]
        %v968 = vld [vmem:[%s6 + $0x3c] sm:$0xf]
        %v969 = vld [vmem:[%s7] sm:$0x1]
        %v971 = vlaneseq
        %v972 = vshrl.u32 %v971, 7
        %v973 = vsub.s32 0, %v972
        %v974 = vrot.slane %v969, %v973
        %v992 = vunpack.c.l.b16 %v953
        %v993 = vunpack.c.l.b16 %v954
        %v994 = vunpack.c.l.b16 %v955
        %v995 = vunpack.c.l.b16 %v956
        %v996 = vunpack.c.l.b16 %v957
        %v997 = vunpack.c.l.b16 %v958
        %v998 = vunpack.c.l.b16 %v959
        %v999 = vunpack.c.l.b16 %v960
        %v1000 = vunpack.c.l.b16 %v961
        %v1001 = vunpack.c.l.b16 %v962
        %v1002 = vunpack.c.l.b16 %v963
        %v1003 = vunpack.c.l.b16 %v964
        %v1004 = vunpack.c.l.b16 %v965
        %v1005 = vunpack.c.l.b16 %v966
        %v1006 = vunpack.c.l.b16 %v967
        %v1007 = vunpack.c.l.b16 %v968
        %v1008 = vpack.c.b16 %v993, %v992
        %v1009 = vpack.c.b16 %v995, %v994
        %v1010 = vpack.c.b16 %v997, %v996
        %v1011 = vpack.c.b16 %v999, %v998
        %v1012 = vpack.c.b16 %v1001, %v1000
        %v1013 = vpack.c.b16 %v1003, %v1002
        %v1014 = vpack.c.b16 %v1005, %v1004
        %v1015 = vpack.c.b16 %v1007, %v1006
        %1024 = vmatprep.subr.bf16.mxu0 0
        %1025 = vmatpush1.bf16.msra.mxu0 %v1015
        %1026 = vmatprep.subr.bf16.mxu0 0
        %1027 = vmatpush1.bf16.msra.mxu0 %v1014
        %1028 = vmatprep.subr.bf16.mxu0 0
        %1029 = vmatpush1.bf16.msra.mxu0 %v1013
        %1030 = vmatprep.subr.bf16.mxu0 0
        %1031 = vmatpush1.bf16.msra.mxu0 %v1012
        %1032 = vmatprep.subr.bf16.mxu0 0
        %1033 = vmatpush1.bf16.msra.mxu0 %v1011
        %1034 = vmatprep.subr.bf16.mxu0 0
        %1035 = vmatpush1.bf16.msra.mxu0 %v1010
        %1036 = vmatprep.subr.bf16.mxu0 0
        %1037 = vmatpush1.bf16.msra.mxu0 %v1009
        %1038 = vmatprep.subr.bf16.mxu0 0
        %1039 = vmatpush1.bf16.msra.mxu0 %v1008
        %1040 = vmatprep.subr.bf16.mxu0 0
        %1041 = vmatpush2.bf16.msra.mxu0 0
        %1042 = vmatprep.subr.bf16.mxu0 0
        %1043 = vmatpush2.bf16.msra.mxu0 0
        %1044 = vmatprep.subr.bf16.mxu0 0
        %1045 = vmatpush2.bf16.msra.mxu0 0
        %1046 = vmatprep.subr.bf16.mxu0 0
        %1047 = vmatpush2.bf16.msra.mxu0 0
        %1048 = vmatprep.subr.bf16.mxu0 0
        %1049 = vmatpush2.bf16.msra.mxu0 0
        %1050 = vmatprep.subr.bf16.mxu0 0
        %1051 = vmatpush2.bf16.msra.mxu0 0
        %1052 = vmatprep.subr.bf16.mxu0 0
        %1053 = vmatpush2.bf16.msra.mxu0 0
        %1054 = vmatprep.subr.bf16.mxu0 0
        %1055 = vmatpush2.bf16.msra.mxu0 0
        %1056 = vmatprep.mubr.bf16.mxu0 0
        %1057 = vmatmul.mubr.bf16.gmra.mxu0 %v945
        %v1058 = vpop.f32.mrf.mxu0
        %v1059 = vadd.f32 %v974, %v1058
        %v1060 = vpop.f32.mrf.mxu0
        %v1061 = vpop.f32.mrf.mxu0
        %v1062 = vadd.f32 %v974, %v1061
        %v1063 = vpop.f32.mrf.mxu0
        %1064 = vmatprep.mubr.bf16.mxu0 0
        %1065 = vmatmul.mubr.bf16.gmra.mxu0 %v946
        %v1066 = vpop.f32.mrf.mxu0
        %v1067 = vadd.f32 %v974, %v1066
        %v1068 = vpop.f32.mrf.mxu0
        %v1069 = vpop.f32.mrf.mxu0
        %v1070 = vadd.f32 %v974, %v1069
        %v1071 = vpop.f32.mrf.mxu0
        %1072 = vmatprep.mubr.bf16.mxu0 0
        %1073 = vmatmul.mubr.bf16.gmra.mxu0 %v947
        %v1074 = vpop.f32.mrf.mxu0
        %v1075 = vadd.f32 %v974, %v1074
        %v1076 = vpop.f32.mrf.mxu0
        %v1077 = vpop.f32.mrf.mxu0
        %v1078 = vadd.f32 %v974, %v1077
        %v1079 = vpop.f32.mrf.mxu0
        %1080 = vmatprep.mubr.bf16.mxu0 0
        %1081 = vmatmul.mubr.bf16.gmra.mxu0 %v948
        %v1082 = vpop.f32.mrf.mxu0
        %v1083 = vadd.f32 %v974, %v1082
        %v1084 = vpop.f32.mrf.mxu0
        %v1085 = vpop.f32.mrf.mxu0
        %v1086 = vadd.f32 %v974, %v1085
        %v1087 = vpop.f32.mrf.mxu0
        %1088 = vmatprep.mubr.bf16.mxu0 0
        %1089 = vmatmul.mubr.bf16.gmra.mxu0 %v949
        %v1090 = vpop.f32.mrf.mxu0
        %v1091 = vadd.f32 %v974, %v1090
        %v1092 = vpop.f32.mrf.mxu0
        %v1093 = vpop.f32.mrf.mxu0
        %v1094 = vadd.f32 %v974, %v1093
        %v1095 = vpop.f32.mrf.mxu0
        %1096 = vmatprep.mubr.bf16.mxu0 0
        %1097 = vmatmul.mubr.bf16.gmra.mxu0 %v950
        %v1098 = vpop.f32.mrf.mxu0
        %v1099 = vadd.f32 %v974, %v1098
        %v1100 = vpop.f32.mrf.mxu0
        %v1101 = vpop.f32.mrf.mxu0
        %v1102 = vadd.f32 %v974, %v1101
        %v1103 = vpop.f32.mrf.mxu0
        %1104 = vmatprep.mubr.bf16.mxu0 0
        %1105 = vmatmul.mubr.bf16.gmra.mxu0 %v951
        %v1106 = vpop.f32.mrf.mxu0
        %v1107 = vadd.f32 %v974, %v1106
        %v1108 = vpop.f32.mrf.mxu0
        %v1109 = vpop.f32.mrf.mxu0
        %v1110 = vadd.f32 %v974, %v1109
        %v1111 = vpop.f32.mrf.mxu0
        %1112 = vmatprep.mubr.bf16.mxu0 0
        %1113 = vmatmul.mubr.bf16.gmra.mxu0 %v952
        %v1114 = vpop.f32.mrf.mxu0
        %v1115 = vadd.f32 %v974, %v1114
        %v1116 = vpop.f32.mrf.mxu0
        %v1117 = vpop.f32.mrf.mxu0
        %v1118 = vadd.f32 %v974, %v1117
        %v1119 = vpop.f32.mrf.mxu0
        %1120 = vdwg.mxu0
        %v1121 = vtanh.pop %v1059
        %v1122 = vtanh.pop %v1062
        %v1123 = vtanh.pop %v1067
        %v1124 = vtanh.pop %v1070
        %v1125 = vtanh.pop %v1075
        %v1126 = vtanh.pop %v1078
        %v1127 = vtanh.pop %v1083
        %v1128 = vtanh.pop %v1086
        %v1129 = vtanh.pop %v1091
        %v1130 = vtanh.pop %v1094
        %v1131 = vtanh.pop %v1099
        %v1132 = vtanh.pop %v1102
        %v1133 = vtanh.pop %v1107
        %v1134 = vtanh.pop %v1110
        %v1135 = vtanh.pop %v1115
        %v1136 = vtanh.pop %v1118
        %1137 = vst [vmem:[%s323] sm:$0xff] %v1121
        %1138 = vst [vmem:[%s323 + $0x8] sm:$0xff] %v1122
        %1139 = vst [vmem:[%s323 + $0x10] sm:$0xff] %v1123
        %1140 = vst [vmem:[%s323 + $0x18] sm:$0xff] %v1124
        %1141 = vst [vmem:[%s323 + $0x20] sm:$0xff] %v1125
        %1142 = vst [vmem:[%s323 + $0x28] sm:$0xff] %v1126
        %1143 = vst [vmem:[%s323 + $0x30] sm:$0xff] %v1127
        %1144 = vst [vmem:[%s323 + $0x38] sm:$0xff] %v1128
        %1145 = vst [vmem:[%s323 + $0x40] sm:$0xff] %v1129
        %1146 = vst [vmem:[%s323 + $0x48] sm:$0xff] %v1130
        %1147 = vst [vmem:[%s323 + $0x50] sm:$0xff] %v1131
        %1148 = vst [vmem:[%s323 + $0x58] sm:$0xff] %v1132
        %1149 = vst [vmem:[%s323 + $0x60] sm:$0xff] %v1133
        %1150 = vst [vmem:[%s323 + $0x68] sm:$0xff] %v1134
        %1151 = vst [vmem:[%s323 + $0x70] sm:$0xff] %v1135
        %1152 = vst [vmem:[%s323 + $0x78] sm:$0xff] %v1136
      $region64: #{actor_forward.1} parent=51 // pred_fallthru
        _
      %s1153 = smul.u32 %s23, %s24
      %s1154 = smul.u32 16, %s1153
      %p1155 = scmp.lt.s32.totalorder %s1154, 31
      %s1156 = scalar_select %p1155, %s1154, 31
      %s1157 = smul.addr %s1156, 8
      %s1158 = scalar_lea.vmem %s8, %s1157
      // Predicated region
      $region65: #{actor_forward.1} parent=51 // pred_check
        %p1159 = pneg %p224
      $region66: #{actor_forward.1} parent=51 // pred_check_branch
        %1161 = sbr.rel (%p1159) target = $region68
      $region67: #{actor_forward.1} parent=51 // pred_region
        %s1162 = smul.u32 %s23, %s24
        %s1163 = smul.u32 16, %s1162
      $region68: #{actor_forward.1} parent=51 // pred_fallthru
        _
    $region52: #{actor_forward.1} parent=5 // pred_fallthru
      _
    %p1164 = scmp.le.s32.totalorder 2, %s14
    // Predicated region
    $region69: #{actor_forward.1} parent=5 // pred_check
      %p1165 = pneg %p1164
    $region70: #{actor_forward.1} parent=5 // pred_check_branch
      %1167 = sbr.rel (%p1165) target = $region72
    $region71: #{actor_forward.1} parent=5 // pred_region
      %s1168 = ssub.s32 %s14, 2
      // Predicated region
      $region73: #{actor_forward.1} parent=71 // pred_check
        %p1169 = pneg %p230
      $region74: #{actor_forward.1} parent=71 // pred_check_branch
        %1171 = sbr.rel (%p1169) target = $region76
      $region75: #{actor_forward.1} parent=71 // pred_region
        %s1172 = smul.u32 %s25, %s26
        %s1173 = smul.u32 16, %s1172
        %p1174 = scmp.lt.s32.totalorder %s1173, 31
        %s1175 = scalar_select %p1174, %s1173, 31
        %s1176 = smul.addr %s1175, 8
        %s1177 = scalar_lea.vmem %s8, %s1176
      $region76: #{actor_forward.1} parent=71 // pred_fallthru
        _
    $region72: #{actor_forward.1} parent=5 // pred_fallthru
      _
  $region6: #{actor_forward.1} parent=0 // loop_footer
    %s18 = sadd.s32 1, %s14
  $region7: #{actor_forward.1} parent=0 // loop_footer_branch
    %13 = sbr.rel target = $region3
  $region8: #{actor_forward.1} parent=0 // loop_exit
    _

</llo_original>
